<compile_context>
chip_gen: v7x
topology: tpu7x:2x2x1
jax: 0.10.0
libtpu: 0.0.40
codegen_flags: <defaults>
</compile_context>

<pallas_src>
import numpy as np
import jax
import jax.numpy as jnp
from jax import lax
from jax.experimental import pallas as pl
from jax.experimental.pallas import tpu as pltpu


def _round_up(x, m):
    return ((x + m - 1) // m) * m


def _slot_kernel(hid_ref, align_ref, w_ref, b_ref, out_ref):
    # hid_ref:   (Bb, S, H)      bf16
    # align_ref: (Bb, S, S)      bf16
    # w_ref:     (O_pad, H)      bf16
    # b_ref:     (O_pad, 1)      f32
    # out_ref:   (Bb, O_pad, S)  f32   (lane-dense; CLS column stripped outside)
    Bb = hid_ref.shape[0]
    w = w_ref[...]                                     # (O, H)
    bias = b_ref[...]                                  # (O, 1)

    for b in range(Bb):                                # static, unrolled
        # Sub-word mean pooling (align_hidden_representation) as a matmul,
        # f32 accumulation on the MXU.
        aligned = lax.dot_general(
            align_ref[b], hid_ref[b],
            dimension_numbers=(((1,), (0,)), ((), ())),
            preferred_element_type=jnp.float32)        # (S, H)

        # Dropout (eval mode) == identity.

        # Slot-filling Linear, oriented to produce (O, S) directly — this IS
        # the permute(0, 2, 1) orientation, so no transposes are needed.
        logits = lax.dot_general(
            w, aligned.astype(jnp.bfloat16),
            dimension_numbers=(((1,), (1,)), ((), ())),
            preferred_element_type=jnp.float32)        # (O, S)

        out_ref[b] = (logits + bias).astype(out_ref.dtype)


def model_ias_forward(last_hidden_state, align_matrix, weight, bias, *, block_b=8):
    """last_hidden_state: [B, S, H] f32, align_matrix: [B, S, S] f32,
    weight: [out_slot, H] f32, bias: [out_slot] f32 -> [B, out_slot, S-1] f32."""
    B, S, H = last_hidden_state.shape
    out_slot = weight.shape[0]

    # Pad out_slot to the sublane granule so the (O, S) stores are unmasked.
    o_pad = _round_up(out_slot, 8)
    if o_pad != out_slot:
        weight = jnp.pad(weight, ((0, o_pad - out_slot), (0, 0)))
        bias = jnp.pad(bias, (0, o_pad - out_slot))

    # Batch block: amortize the ~0.35us/step pipeline overhead, but keep at
    # least 2 grid steps when B allows so both v7x TensorCores get work.
    # VMEM budget (double-buffered, bf16 in / f32 out):
    #   ~2*(Bb*S*H + Bb*S*S)*2B + 2*Bb*o_pad*S*4B  — sized well under v7x 64MiB.
    Bb = min(block_b, max(1, B // 2)) if B >= 2 else 1
    Bp = _round_up(B, Bb)
    if Bp != B:
        pad = Bp - B
        last_hidden_state = jnp.pad(last_hidden_state, ((0, pad), (0, 0), (0, 0)))
        align_matrix = jnp.pad(align_matrix, ((0, pad), (0, 0), (0, 0)))

    # bf16 inputs: halve HBM->VMEM DMA bytes, bf16 MXU path (f32 accumulate).
    hid_bf = last_hidden_state.astype(jnp.bfloat16)
    align_bf = align_matrix.astype(jnp.bfloat16)
    w_bf = weight.astype(jnp.bfloat16)
    bias_col = bias.reshape(o_pad, 1).astype(jnp.float32)

    out = pl.pallas_call(
        _slot_kernel,
        out_shape=jax.ShapeDtypeStruct((Bp, o_pad, S), jnp.float32),
        grid_spec=pltpu.PrefetchScalarGridSpec(
            num_scalar_prefetch=0,
            grid=(Bp // Bb,),
            in_specs=[
                pl.BlockSpec((Bb, S, H), lambda b: (b, 0, 0)),
                pl.BlockSpec((Bb, S, S), lambda b: (b, 0, 0)),
                pl.BlockSpec((o_pad, H), lambda b: (0, 0)),
                pl.BlockSpec((o_pad, 1), lambda b: (0, 0)),
            ],
            out_specs=pl.BlockSpec((Bb, o_pad, S), lambda b: (b, 0, 0)),
        ),
        compiler_params=pltpu.CompilerParams(
            dimension_semantics=("parallel",),
            vmem_limit_bytes=64 * 1024 * 1024),
    )(hid_bf, align_bf, w_bf, bias_col)

    # Strip out_slot padding, batch padding, and the [CLS] column here
    # (== slotFillingLayer(aligned[:, 1:]) followed by permute(0, 2, 1)).
    return out[:B, :out_slot, 1:]


def build_alignment_matrix(subword_lengths_per_batch, S):
    """Glue: A[b, j, span_j] = 1/len(span_j) over word j's sub-word span,
    zero rows for padding — mirrors align_hidden_representation."""
    B = len(subword_lengths_per_batch)
    A = np.zeros((B, S, S), dtype=np.float32)
    for b, lens in enumerate(subword_lengths_per_batch):
        idx = 0
        for j, L in enumerate(lens):
            span = [idx + k for k in range(L) if idx + k < S]
            if span:
                A[b, j, span] = 1.0 / len(span)
            idx += L
        # remaining rows stay zero (the torch.zeros padding)
    return jnp.asarray(A)


if __name__ == "__main__":
    # Small, deterministic shapes.
    B, S, H, OUT_SLOT = 2, 8, 32, 5

    key = jax.random.PRNGKey(0)
    k_hid, k_w, k_b = jax.random.split(key, 3)

    # Synthetic BERT last_hidden_state (the external self.bert output).
    # TODO(synk): the BERT encoder itself is an external module, not re-implemented here.
    last_hidden_state = jax.random.normal(k_hid, (B, S, H), dtype=jnp.float32)

    # slotFillingLayer params: weight ~ U(-0.01, 0.01) (module init),
    # bias ~ U(-1/sqrt(H), 1/sqrt(H)) (PyTorch Linear default).
    weight = jax.random.uniform(k_w, (OUT_SLOT, H), minval=-0.01, maxval=0.01,
                                dtype=jnp.float32)
    bound = 1.0 / np.sqrt(H)
    bias = jax.random.uniform(k_b, (OUT_SLOT,), minval=-bound, maxval=bound,
                              dtype=jnp.float32)

    # Synthetic tokenization (stands in for text_suddivided / length_token_bert).
    subword_lengths = [
        [1, 2, 1, 3],   # 4 words -> 7 tokens, zero-pad rows after
        [2, 2, 1],      # 3 words -> 5 tokens, zero-pad rows after
    ]
    align_matrix = build_alignment_matrix(subword_lengths, S)

    out = model_ias_forward(last_hidden_state, align_matrix, weight, bias)
    out = jax.block_until_ready(out)
    assert out.shape == (B, OUT_SLOT, S - 1)

    # Plain-JAX f32 reference check (kernel uses bf16 inputs -> relaxed tol).
    aligned_ref = jnp.einsum("bij,bjh->bih", align_matrix, last_hidden_state)
    ref = jnp.einsum("bsh,oh->bso", aligned_ref[:, 1:], weight) + bias
    ref = jnp.transpose(ref, (0, 2, 1))
    np.testing.assert_allclose(np.asarray(out), np.asarray(ref),
                               rtol=2e-2, atol=1e-2)

    print("KERNEL_OK")
</pallas_src>

<mosaic_0001>
module attributes {stable_mosaic.version = 11 : i64} {
  func.func @_slot_kernel(%arg0: i32, %arg1: memref<1x8x32xbf16, #tpu.memory_space<vmem>>, %arg2: memref<1x8x8xbf16, #tpu.memory_space<vmem>>, %arg3: memref<8x32xbf16, #tpu.memory_space<vmem>>, %arg4: memref<8x1xf32, #tpu.memory_space<vmem>>, %arg5: memref<1x8x8xf32, #tpu.memory_space<vmem>>) attributes {dimension_semantics = [#tpu.dimension_semantics<parallel>], iteration_bounds = array<i64: 2>, scalar_prefetch = 0 : i64, scratch_operands = 0 : i64, tpu.core_type = #tpu.core_type<tc>, window_params = [{transform_indices = @transform_0, window_bounds = array<i64: 1, 8, 32>}, {transform_indices = @transform_1, window_bounds = array<i64: 1, 8, 8>}, {pipeline_mode = #tpu.pipeline_mode<synchronous>, transform_indices = @transform_2, window_bounds = array<i64: 8, 32>}, {pipeline_mode = #tpu.pipeline_mode<synchronous>, transform_indices = @transform_3, window_bounds = array<i64: 8, 1>}, {transform_indices = @transform_4, window_bounds = array<i64: 1, 8, 8>}]} {
    %c0 = arith.constant 0 : index
    %c0_0 = arith.constant 0 : index
    %0 = vector.load %arg3[%c0, %c0_0] : memref<8x32xbf16, #tpu.memory_space<vmem>>, vector<8x32xbf16>
    %c0_1 = arith.constant 0 : index
    %c0_2 = arith.constant 0 : index
    %1 = vector.load %arg4[%c0_1, %c0_2] : memref<8x1xf32, #tpu.memory_space<vmem>>, vector<8x1xf32>
    %c0_3 = arith.constant 0 : index
    %c0_4 = arith.constant 0 : index
    %c0_5 = arith.constant 0 : index
    %2 = vector.load %arg2[%c0_3, %c0_4, %c0_5] : memref<1x8x8xbf16, #tpu.memory_space<vmem>>, vector<1x8x8xbf16>
    %3 = vector.shape_cast %2 : vector<1x8x8xbf16> to vector<8x8xbf16>
    %c0_6 = arith.constant 0 : index
    %c0_7 = arith.constant 0 : index
    %c0_8 = arith.constant 0 : index
    %4 = vector.load %arg1[%c0_6, %c0_7, %c0_8] : memref<1x8x32xbf16, #tpu.memory_space<vmem>>, vector<1x8x32xbf16>
    %5 = vector.shape_cast %4 : vector<1x8x32xbf16> to vector<8x32xbf16>
    %cst = arith.constant dense<0.000000e+00> : vector<8x32xf32>
    %6 = tpu.matmul %3, %5, %cst {dimension_numbers = #tpu.dot_dimension_numbers<[1], [0], [0], [1], [0, 0, 1, 1], [], []>} : vector<8x8xbf16>, vector<8x32xbf16>, vector<8x32xf32> -> vector<8x32xf32>
    %7 = arith.truncf %6 : vector<8x32xf32> to vector<8x32xbf16>
    %cst_9 = arith.constant dense<0.000000e+00> : vector<8x8xf32>
    %8 = tpu.matmul %0, %7, %cst_9 {dimension_numbers = #tpu.dot_dimension_numbers<[1], [1], [0], [0], [0, 0, 1, 0], [], []>} : vector<8x32xbf16>, vector<8x32xbf16>, vector<8x8xf32> -> vector<8x8xf32>
    %9 = vector.broadcast %1 : vector<8x1xf32> to vector<8x8xf32>
    %10 = arith.addf %8, %9 : vector<8x8xf32>
    %c0_10 = arith.constant 0 : index
    %c0_11 = arith.constant 0 : index
    %c0_12 = arith.constant 0 : index
    %11 = vector.load %arg5[%c0_10, %c0_11, %c0_12] : memref<1x8x8xf32, #tpu.memory_space<vmem>>, vector<1x8x8xf32>
    %12 = vector.shape_cast %11 : vector<1x8x8xf32> to vector<8x8xf32>
    %13 = vector.shape_cast %10 : vector<8x8xf32> to vector<1x8x8xf32>
    tpu.vector_store %arg5[%c0_10, %c0_11, %c0_12], %13 {strides = array<i32>} : memref<1x8x8xf32, #tpu.memory_space<vmem>>, vector<1x8x8xf32>,
    return
  }
  func.func @transform_0(%arg0: i32) -> (i32, i32, i32) {
    %c0_i32 = arith.constant 0 : i32
    %c0_i32_0 = arith.constant 0 : i32
    %c0_i32_1 = arith.constant 0 : i32
    return %arg0, %c0_i32, %c0_i32_0 : i32, i32, i32
  }
  func.func @transform_1(%arg0: i32) -> (i32, i32, i32) {
    %c0_i32 = arith.constant 0 : i32
    %c0_i32_0 = arith.constant 0 : i32
    %c0_i32_1 = arith.constant 0 : i32
    return %arg0, %c0_i32, %c0_i32_0 : i32, i32, i32
  }
  func.func @transform_2(%arg0: i32) -> (i32, i32) {
    %c0_i32 = arith.constant 0 : i32
    %c0_i32_0 = arith.constant 0 : i32
    %c0_i32_1 = arith.constant 0 : i32
    return %c0_i32, %c0_i32_0 : i32, i32
  }
  func.func @transform_3(%arg0: i32) -> (i32, i32) {
    %c0_i32 = arith.constant 0 : i32
    %c0_i32_0 = arith.constant 0 : i32
    %c0_i32_1 = arith.constant 0 : i32
    return %c0_i32, %c0_i32_0 : i32, i32
  }
  func.func @transform_4(%arg0: i32) -> (i32, i32, i32) {
    %c0_i32 = arith.constant 0 : i32
    %c0_i32_0 = arith.constant 0 : i32
    %c0_i32_1 = arith.constant 0 : i32
    return %arg0, %c0_i32, %c0_i32_0 : i32, i32, i32
  }
}

</mosaic_0001>

<llo_original>
// kernel: tpu_custom_call.1
$region0: #{tpu_custom_call.1}
  #allocation0 [shape = 'u32[]', space=smem, size = 0x4, offset = 0x4, fixed_abs, tag = 'smem constant byte address 0x4 - core index']
  #allocation1 [shape = 'u32[144,128]{1,0:T(1,128)}', space=vmem, size = 0x12000, scoped, tag = 'internal scratch']
  %s0 = inlined_call_operand.hbm [shape: bf16[2,8,32], index: 0, kind: input, shape index: {}]
  %s1 = inlined_call_operand.hbm [shape: bf16[2,8,8], index: 1, kind: input, shape index: {}]
  %s2 = inlined_call_operand.hbm [shape: bf16[8,32], index: 2, kind: input, shape index: {}]
  %s3 = inlined_call_operand.hbm [shape: f32[8,1], index: 3, kind: input, shape index: {}]
  %s4 = inlined_call_operand.hbm [shape: f32[2,8,8], index: 4, kind: output, shape index: {}]
  %s5 = sld [smem:[#allocation0]]
  $region65: #{tpu_custom_call.1} parent=0
    _
  %s7 = ssub.s32 1, %s5
  %s8 = scalar_select 0, %s7, %s5
  $region1: #{tpu_custom_call.1} parent=0
    #allocation2 [shape = 'u8[4096]{0}', space=vmem, size = 0x1000, scoped, tag = 'input window, operand 0']
    #allocation3 [shape = 's32[2]{0}', space=sflag, size = 0x8, scoped, tag = 'scoped memory for tpu_custom_call.1']
    #allocation4 [shape = 's32[2]{0}', space=sflag, size = 0x8, scoped, tag = 'scoped memory for tpu_custom_call.1']
    #allocation5 [shape = 'u8[4096]{0}', space=vmem, size = 0x1000, scoped, tag = 'input window, operand 1']
    #allocation6 [shape = 's32[2]{0}', space=sflag, size = 0x8, scoped, tag = 'scoped memory for tpu_custom_call.1']
    #allocation7 [shape = 'u8[2048]{0}', space=vmem, size = 0x800, scoped, tag = 'input window, operand 2, single buffered']
    #allocation8 [shape = 'u8[4096]{0}', space=vmem, size = 0x1000, scoped, tag = 'input window, operand 3, single buffered']
    #allocation9 [shape = 's32[1]{0}', space=sflag, size = 0x4, scoped, tag = 'scoped memory for tpu_custom_call.1']
    #allocation10 [shape = 'u8[8192]{0}', space=vmem, size = 0x2000, scoped, tag = 'output window, operand 0']
    %9 = vsyncpa [#allocation3], 0
    %s10 = scalar_lea.sflag [#allocation3], 1
    %11 = vsyncpa %s10, 0
    %12 = vsyncpa [#allocation6], 0
    %s13 = scalar_lea.sflag [#allocation6], 1
    %14 = vsyncpa %s13, 0
    %15 = vsyncpa [#allocation9], 0
    %16 = vsyncpa [#allocation4], 0
    %s17 = scalar_lea.sflag [#allocation4], 1
    %18 = vsyncpa %s17, 0
    loop: start=0, step=1, limit=4
    $region2: #{tpu_custom_call.1} parent=1 // loop_pre_header
      _
    $region3: #{tpu_custom_call.1} parent=1 // loop_header
      %s20 = sphi 0, %s24
      %p21 = scmp.ge.s32.totalorder %s20, 4
      %s30 = sphi 0, %s32
      %s33 = sphi 0, %s30
      %s34 = sphi 0, %s33
      %s50 = sphi 0, %s34
      %s56 = sphi 0, %s58
      %s59 = sphi 0, %s56
      %s60 = sphi 0, %s59
      %s76 = sphi 0, %s60
      %s80 = sphi 0, %s80
      %s82 = sphi 0, %s80
      %s83 = sphi 0, %s82
      %s97 = sphi 0, %s83
      %s101 = sphi 0, %s101
      %s103 = sphi 0, %s101
      %s104 = sphi 0, %s103
      %s118 = sphi 0, %s104
      %s124 = sphi 0, %s126
      %s127 = sphi 0, %s124
      %s128 = sphi 0, %s127
      %s144 = sphi 0, %s128
    $region4: #{tpu_custom_call.1} parent=1 // loop_header_branch
      %23 = sbr.rel (%p21) target = $region8
    $region5: #{tpu_custom_call.1} parent=1 // loop_body
      %s25 = ssub.s32 %s20, 1
      %s26 = ssub.s32 %s20, 2
      %s27 = sadd.s32 %s20, 1
      %s28 = ssub.s32 %s20, %s27
      %p29 = scmp.eq.s32.totalorder %s28, 0
      %s31 = sadd.s32 %s30, 1
      %s32 = scalar_select %p29, %s30, %s31
      %p35 = pneg %p29
      %p36 = scmp.eq.s32.totalorder %s20, 1
      %p37 = por %p35, %p36
      %p38 = scmp.ne.s32.totalorder %s30, %s33
      %p39 = scmp.eq.s32.totalorder %s20, 0
      %p40 = por %p38, %p39
      %p41 = scmp.ne.s32.totalorder %s30, %s33
      %p42 = scmp.eq.s32.totalorder %s25, 1
      %p43 = por %p41, %p42
      %p44 = scmp.ne.s32.totalorder %s33, %s34
      %p45 = scmp.eq.s32.totalorder %s25, 0
      %p46 = por %p44, %p45
      %p47 = scmp.ne.s32.totalorder %s33, %s34
      %p48 = scmp.eq.s32.totalorder %s26, 1
      %p49 = por %p47, %p48
      %p51 = scmp.ne.s32.totalorder %s34, %s50
      %p52 = scmp.eq.s32.totalorder %s26, 0
      %p53 = por %p51, %p52
      %s54 = ssub.s32 %s20, %s27
      %p55 = scmp.eq.s32.totalorder %s54, 0
      %s57 = sadd.s32 %s56, 1
      %s58 = scalar_select %p55, %s56, %s57
      %p61 = pneg %p55
      %p62 = scmp.eq.s32.totalorder %s20, 1
      %p63 = por %p61, %p62
      %p64 = scmp.ne.s32.totalorder %s56, %s59
      %p65 = scmp.eq.s32.totalorder %s20, 0
      %p66 = por %p64, %p65
      %p67 = scmp.ne.s32.totalorder %s56, %s59
      %p68 = scmp.eq.s32.totalorder %s25, 1
      %p69 = por %p67, %p68
      %p70 = scmp.ne.s32.totalorder %s59, %s60
      %p71 = scmp.eq.s32.totalorder %s25, 0
      %p72 = por %p70, %p71
      %p73 = scmp.ne.s32.totalorder %s59, %s60
      %p74 = scmp.eq.s32.totalorder %s26, 1
      %p75 = por %p73, %p74
      %p77 = scmp.ne.s32.totalorder %s60, %s76
      %p78 = scmp.eq.s32.totalorder %s26, 0
      %p79 = por %p77, %p78
      %s81 = sadd.s32 %s80, 1
      %p84 = scmp.eq.s32.totalorder %s20, 1
      %p85 = scmp.ne.s32.totalorder %s80, %s82
      %p86 = scmp.eq.s32.totalorder %s20, 0
      %p87 = por %p85, %p86
      %p88 = scmp.ne.s32.totalorder %s80, %s82
      %p89 = scmp.eq.s32.totalorder %s25, 1
      %p90 = por %p88, %p89
      %p91 = scmp.ne.s32.totalorder %s82, %s83
      %p92 = scmp.eq.s32.totalorder %s25, 0
      %p93 = por %p91, %p92
      %p94 = scmp.ne.s32.totalorder %s82, %s83
      %p95 = scmp.eq.s32.totalorder %s26, 1
      %p96 = por %p94, %p95
      %p98 = scmp.ne.s32.totalorder %s83, %s97
      %p99 = scmp.eq.s32.totalorder %s26, 0
      %p100 = por %p98, %p99
      %s102 = sadd.s32 %s101, 1
      %p105 = scmp.eq.s32.totalorder %s20, 1
      %p106 = scmp.ne.s32.totalorder %s101, %s103
      %p107 = scmp.eq.s32.totalorder %s20, 0
      %p108 = por %p106, %p107
      %p109 = scmp.ne.s32.totalorder %s101, %s103
      %p110 = scmp.eq.s32.totalorder %s25, 1
      %p111 = por %p109, %p110
      %p112 = scmp.ne.s32.totalorder %s103, %s104
      %p113 = scmp.eq.s32.totalorder %s25, 0
      %p114 = por %p112, %p113
      %p115 = scmp.ne.s32.totalorder %s103, %s104
      %p116 = scmp.eq.s32.totalorder %s26, 1
      %p117 = por %p115, %p116
      %p119 = scmp.ne.s32.totalorder %s104, %s118
      %p120 = scmp.eq.s32.totalorder %s26, 0
      %p121 = por %p119, %p120
      %s122 = ssub.s32 %s20, %s27
      %p123 = scmp.eq.s32.totalorder %s122, 0
      %s125 = sadd.s32 %s124, 1
      %s126 = scalar_select %p123, %s124, %s125
      %p129 = pneg %p123
      %p130 = scmp.eq.s32.totalorder %s20, 1
      %p131 = por %p129, %p130
      %p132 = scmp.ne.s32.totalorder %s124, %s127
      %p133 = scmp.eq.s32.totalorder %s20, 0
      %p134 = por %p132, %p133
      %p135 = scmp.ne.s32.totalorder %s124, %s127
      %p136 = scmp.eq.s32.totalorder %s25, 1
      %p137 = por %p135, %p136
      %p138 = scmp.ne.s32.totalorder %s127, %s128
      %p139 = scmp.eq.s32.totalorder %s25, 0
      %p140 = por %p138, %p139
      %p141 = scmp.ne.s32.totalorder %s127, %s128
      %p142 = scmp.eq.s32.totalorder %s26, 1
      %p143 = por %p141, %p142
      %p145 = scmp.ne.s32.totalorder %s128, %s144
      %p146 = scmp.eq.s32.totalorder %s26, 0
      %p147 = por %p145, %p146
      %p148 = scmp.le.s32.totalorder 1, %s20
      %p149 = scmp.lt.s32.totalorder %s20, 3
      %p150 = pnand %p148, %p149
      %p151 = pneg %p150
      // Predicated region
      $region9: #{tpu_custom_call.1} parent=5 // pred_check
        _
      $region10: #{tpu_custom_call.1} parent=5 // pred_check_branch
        %153 = sbr.rel (%p150) target = $region12
      $region11: #{tpu_custom_call.1} parent=5 // pred_region
        %s154 = ssub.s32 %s20, 1
        // Predicated region
        $region13: #{tpu_custom_call.1} parent=11 // pred_check
          %p155 = pneg %p93
        $region14: #{tpu_custom_call.1} parent=11 // pred_check_branch
          %157 = sbr.rel (%p155) target = $region16
        $region15: #{tpu_custom_call.1} parent=11 // pred_region
          %s159 = ssub.s32 64, 64
          %160 = vsyncadd [#allocation6], %s159
          %s162 = sshll.u32 [#allocation7], 4
          %s163 = int_to_ptr.vmem [resolvable:$true] %s162
          %165 = dma.hbm_to_vmem [thread:$0]  %s2, 64, %s163, [#allocation6]
        $region16: #{tpu_custom_call.1} parent=11 // pred_fallthru
          _
        // Predicated region
        $region17: #{tpu_custom_call.1} parent=11 // pred_check
          %p166 = pneg %p114
        $region18: #{tpu_custom_call.1} parent=11 // pred_check_branch
          %168 = sbr.rel (%p166) target = $region20
        $region19: #{tpu_custom_call.1} parent=11 // pred_region
          %s170 = ssub.s32 128, 128
          %171 = vsyncadd [#allocation9], %s170
          %s173 = sshll.u32 [#allocation8], 4
          %s174 = int_to_ptr.vmem [resolvable:$true] %s173
          %176 = dma.hbm_to_vmem [thread:$0]  %s3, 128, %s174, [#allocation9]
        $region20: #{tpu_custom_call.1} parent=11 // pred_fallthru
          _
      $region12: #{tpu_custom_call.1} parent=5 // pred_fallthru
        _
      %p177 = scmp.lt.s32.totalorder %s20, 2
      // Predicated region
      $region21: #{tpu_custom_call.1} parent=5 // pred_check
        %p178 = pneg %p177
      $region22: #{tpu_custom_call.1} parent=5 // pred_check_branch
        %180 = sbr.rel (%p178) target = $region24
      $region23: #{tpu_custom_call.1} parent=5 // pred_region
        // Predicated region
        $region25: #{tpu_custom_call.1} parent=23 // pred_check
          %p181 = pneg %p40
        $region26: #{tpu_custom_call.1} parent=23 // pred_check_branch
          %183 = sbr.rel (%p181) target = $region28
        $region27: #{tpu_custom_call.1} parent=23 // pred_region
          %s184 = sand.u32 %s30, 1
          %s185 = scalar_lea.sflag [#allocation3], %s184
          %s186 = sand.u32 %s30, 1
          %s187 = smul.addr %s186, 4
          %s188 = scalar_lea.vmem [#allocation2], %s187
          %s190 = ssub.s32 64, 64
          %191 = vsyncadd %s185, %s190
          %s192 = smul.addr %s20, 64
          %s193 = scalar_lea.hbm %s0, %s192
          %s195 = sshll.u32 %s188, 4
          %s196 = int_to_ptr.vmem [resolvable:$true] %s195
          %198 = dma.hbm_to_vmem [thread:$0]  %s193, 64, %s196, %s185
        $region28: #{tpu_custom_call.1} parent=23 // pred_fallthru
          _
        // Predicated region
        $region29: #{tpu_custom_call.1} parent=23 // pred_check
          %p199 = pneg %p66
        $region30: #{tpu_custom_call.1} parent=23 // pred_check_branch
          %201 = sbr.rel (%p199) target = $region32
        $region31: #{tpu_custom_call.1} parent=23 // pred_region
          %s202 = sand.u32 %s20, 1
          %s203 = scalar_lea.sflag [#allocation6], %s202
          %s204 = sand.u32 %s56, 1
          %s205 = smul.addr %s204, 4
          %s206 = scalar_lea.vmem [#allocation5], %s205
          %s208 = ssub.s32 64, 64
          %209 = vsyncadd %s203, %s208
          %s210 = smul.addr %s20, 64
          %s211 = scalar_lea.hbm %s1, %s210
          %s213 = sshll.u32 %s206, 4
          %s214 = int_to_ptr.vmem [resolvable:$true] %s213
          %216 = dma.hbm_to_vmem [thread:$0]  %s211, 64, %s214, %s203
        $region32: #{tpu_custom_call.1} parent=23 // pred_fallthru
          _
      $region24: #{tpu_custom_call.1} parent=5 // pred_fallthru
        _
      %p217 = scmp.le.s32.totalorder 1, %s20
      %p218 = scmp.lt.s32.totalorder %s20, 3
      %p219 = pnand %p217, %p218
      %p220 = pneg %p219
      // Predicated region
      $region33: #{tpu_custom_call.1} parent=5 // pred_check
        _
      $region34: #{tpu_custom_call.1} parent=5 // pred_check_branch
        %222 = sbr.rel (%p219) target = $region36
      $region35: #{tpu_custom_call.1} parent=5 // pred_region
        %s223 = ssub.s32 %s20, 1
        %s224 = sand.u32 %s33, 1
        %s225 = scalar_lea.sflag [#allocation3], %s224
        %s226 = sand.u32 %s33, 1
        %s227 = smul.addr %s226, 4
        %s228 = scalar_lea.vmem [#allocation2], %s227
        // Predicated region
        $region37: #{tpu_custom_call.1} parent=35 // pred_check
          %p229 = pneg %p46
        $region38: #{tpu_custom_call.1} parent=35 // pred_check_branch
          %231 = sbr.rel (%p229) target = $region40
        $region39: #{tpu_custom_call.1} parent=35 // pred_region
          %232 = dma.done %s225, 64
        $region40: #{tpu_custom_call.1} parent=35 // pred_fallthru
          _
        %s233 = sand.u32 %s25, 1
        %s234 = scalar_lea.sflag [#allocation6], %s233
        %s235 = sand.u32 %s59, 1
        %s236 = smul.addr %s235, 4
        %s237 = scalar_lea.vmem [#allocation5], %s236
        // Predicated region
        $region41: #{tpu_custom_call.1} parent=35 // pred_check
          %p238 = pneg %p72
        $region42: #{tpu_custom_call.1} parent=35 // pred_check_branch
          %240 = sbr.rel (%p238) target = $region44
        $region43: #{tpu_custom_call.1} parent=35 // pred_region
          %241 = dma.done %s234, 64
        $region44: #{tpu_custom_call.1} parent=35 // pred_fallthru
          _
        // Predicated region
        $region45: #{tpu_custom_call.1} parent=35 // pred_check
          %p242 = pneg %p93
        $region46: #{tpu_custom_call.1} parent=35 // pred_check_branch
          %244 = sbr.rel (%p242) target = $region48
        $region47: #{tpu_custom_call.1} parent=35 // pred_region
          %245 = dma.done [#allocation6], 64
        $region48: #{tpu_custom_call.1} parent=35 // pred_fallthru
          _
        // Predicated region
        $region49: #{tpu_custom_call.1} parent=35 // pred_check
          %p246 = pneg %p114
        $region50: #{tpu_custom_call.1} parent=35 // pred_check_branch
          %248 = sbr.rel (%p246) target = $region52
        $region51: #{tpu_custom_call.1} parent=35 // pred_region
          %249 = dma.done [#allocation9], 128
        $region52: #{tpu_custom_call.1} parent=35 // pred_fallthru
          _
        %s250 = sand.u32 %s33, 1
        %s251 = scalar_lea.sflag [#allocation3], %s250
        %s252 = sand.u32 %s33, 1
        %s253 = smul.addr %s252, 4
        %s254 = scalar_lea.vmem [#allocation2], %s253
        %p255 = pneg %p46
        %p256 = pneg %p43
        %s257 = sand.u32 %s25, 1
        %s258 = scalar_lea.sflag [#allocation6], %s257
        %s259 = sand.u32 %s59, 1
        %s260 = smul.addr %s259, 4
        %s261 = scalar_lea.vmem [#allocation5], %s260
        %p262 = pneg %p72
        %p263 = pneg %p69
        %p264 = pneg %p93
        %p265 = pneg %p90
        %p266 = pneg %p114
        %p267 = pneg %p111
        %p268 = pneg %p140
        %p269 = pneg %p137
        %s270 = sand.u32 %s127, 1
        %s271 = scalar_lea.sflag [#allocation4], %s270
        %s272 = sand.u32 %s127, 1
        %s273 = smul.addr %s272, 8
        %s274 = scalar_lea.vmem [#allocation10], %s273
        %v276 = vld [vmem:[#allocation7] sm:$0xf]
        %v277 = vld [vmem:[#allocation8] sm:$0xff]
        %v278 = vld [vmem:[%s237] sm:$0xf]
        %v279 = vld [vmem:[%s228] sm:$0xf]
        %vm280 = vcmask 64512
        %v282 = vsel %vm280, %v278, 0
        %vm284 = vcmask 1043456
        %v286 = vsel %vm284, %v279, 0
        %288 = vmatprep.subr.bf16.mxu0 0
        %289 = vmatpush1.bf16.msra.mxu0 %v286
        %290 = vmatprep.subr.bf16.mxu0 0
        %291 = vmatpush1.bf16.msra.mxu0 0
        %292 = vmatprep.subr.bf16.mxu0 0
        %293 = vmatpush1.bf16.msra.mxu0 0
        %294 = vmatprep.subr.bf16.mxu0 0
        %295 = vmatpush1.bf16.msra.mxu0 0
        %296 = vmatprep.subr.bf16.mxu0 0
        %297 = vmatpush1.bf16.msra.mxu0 0
        %298 = vmatprep.subr.bf16.mxu0 0
        %299 = vmatpush1.bf16.msra.mxu0 0
        %300 = vmatprep.subr.bf16.mxu0 0
        %301 = vmatpush1.bf16.msra.mxu0 0
        %302 = vmatprep.subr.bf16.mxu0 0
        %303 = vmatpush1.bf16.msra.mxu0 0
        %304 = vmatprep.subr.bf16.mxu0 0
        %305 = vmatpush1.bf16.msra.mxu0 0
        %306 = vmatprep.subr.bf16.mxu0 0
        %307 = vmatpush1.bf16.msra.mxu0 0
        %308 = vmatprep.subr.bf16.mxu0 0
        %309 = vmatpush1.bf16.msra.mxu0 0
        %310 = vmatprep.subr.bf16.mxu0 0
        %311 = vmatpush1.bf16.msra.mxu0 0
        %312 = vmatprep.subr.bf16.mxu0 0
        %313 = vmatpush1.bf16.msra.mxu0 0
        %314 = vmatprep.subr.bf16.mxu0 0
        %315 = vmatpush1.bf16.msra.mxu0 0
        %316 = vmatprep.subr.bf16.mxu0 0
        %317 = vmatpush1.bf16.msra.mxu0 0
        %318 = vmatprep.subr.bf16.mxu0 0
        %319 = vmatpush1.bf16.msra.mxu0 0
        %320 = vmatprep.mubr.bf16.mxu0 0
        %321 = vmatmul.mubr.bf16.gmra.mrb[0].mxu0 %v282
        %v322 = vpop.f32.mrb[0].mxu0
        %v323 = vadd.f32 0.0, %v322
        %v324 = vpop.f32.mrb[0].mxu0
        %v325 = vpop.f32.mrb[0].mxu0
        %v326 = vpop.f32.mrb[0].mxu0
        %327 = vdwg.mxu0
        %v328 = vpack.c.bf16 %v323, %v323
        %330 = vset.pattern.permute.xlu0 0
        %331 = vperm.xlu0 %330, %v277
        %v332 = vpop.permute.xlu0 %331
        %vm334 = vcmask 261120
        %v336 = vsel %vm334, %v276, 0
        %v339 = vsel %vm334, %v328, 0
        %341 = vmatprep.subr.bf16.mxu0 0
        %342 = vmatpush1.bf16.xpose.msra.mxu0 %v339
        %343 = vmatprep.subr.bf16.mxu0 0
        %344 = vmatpush1.bf16.xpose.msra.mxu0 0
        %345 = vmatprep.subr.bf16.mxu0 0
        %346 = vmatpush1.bf16.xpose.msra.mxu0 0
        %347 = vmatprep.subr.bf16.mxu0 0
        %348 = vmatpush1.bf16.xpose.msra.mxu0 0
        %349 = vmatprep.subr.bf16.mxu0 0
        %350 = vmatpush1.bf16.xpose.msra.mxu0 0
        %351 = vmatprep.subr.bf16.mxu0 0
        %352 = vmatpush1.bf16.xpose.msra.mxu0 0
        %353 = vmatprep.subr.bf16.mxu0 0
        %354 = vmatpush1.bf16.xpose.msra.mxu0 0
        %355 = vmatprep.subr.bf16.mxu0 0
        %356 = vmatpush1.bf16.xpose.msra.mxu0 0
        %357 = vmatprep.subr.bf16.mxu0 0
        %358 = vmatpush1.bf16.xpose.msra.mxu0 0
        %359 = vmatprep.subr.bf16.mxu0 0
        %360 = vmatpush1.bf16.xpose.msra.mxu0 0
        %361 = vmatprep.subr.bf16.mxu0 0
        %362 = vmatpush1.bf16.xpose.msra.mxu0 0
        %363 = vmatprep.subr.bf16.mxu0 0
        %364 = vmatpush1.bf16.xpose.msra.mxu0 0
        %365 = vmatprep.subr.bf16.mxu0 0
        %366 = vmatpush1.bf16.xpose.msra.mxu0 0
        %367 = vmatprep.subr.bf16.mxu0 0
        %368 = vmatpush1.bf16.xpose.msra.mxu0 0
        %369 = vmatprep.subr.bf16.mxu0 0
        %370 = vmatpush1.bf16.xpose.msra.mxu0 0
        %371 = vmatprep.subr.bf16.mxu0 0
        %372 = vmatpush1.bf16.xpose.msra.mxu0 0
        %373 = vmatprep.mubr.bf16.mxu0 0
        %374 = vmatmul.mubr.bf16.gmra.mrb[0].mxu0 %v336
        %v375 = vpop.f32.mrb[0].mxu0
        %v376 = vadd.f32 %v332, %v375
        %v377 = vpop.f32.mrb[0].mxu0
        %v378 = vpop.f32.mrb[0].mxu0
        %v379 = vpop.f32.mrb[0].mxu0
        %380 = vdwg.mxu0
        %381 = vst.msk [vmem:[%s274] sm:$0xff] %vm280, %v376
        %s382 = sand.u32 %s127, 1
        %s383 = scalar_lea.sflag [#allocation4], %s382
        %s384 = sand.u32 %s127, 1
        %s385 = smul.addr %s384, 8
        %s386 = scalar_lea.vmem [#allocation10], %s385
        // Predicated region
        $region53: #{tpu_custom_call.1} parent=35 // pred_check
          %p387 = pneg %p137
        $region54: #{tpu_custom_call.1} parent=35 // pred_check_branch
          %389 = sbr.rel (%p387) target = $region56
        $region55: #{tpu_custom_call.1} parent=35 // pred_region
          %s391 = ssub.s32 128, 128
          %392 = vsyncadd %s383, %s391
          %s393 = smul.addr %s25, 128
          %s394 = scalar_lea.hbm %s4, %s393
          %s396 = sshll.u32 %s386, 4
          %s397 = int_to_ptr.vmem [resolvable:$true] %s396
          %399 = dma.vmem_to_hbm [thread:$0]  %s397, 128, %s394, %s383
        $region56: #{tpu_custom_call.1} parent=35 // pred_fallthru
          _
      $region36: #{tpu_custom_call.1} parent=5 // pred_fallthru
        _
      %p400 = scmp.le.s32.totalorder 2, %s20
      // Predicated region
      $region57: #{tpu_custom_call.1} parent=5 // pred_check
        %p401 = pneg %p400
      $region58: #{tpu_custom_call.1} parent=5 // pred_check_branch
        %403 = sbr.rel (%p401) target = $region60
      $region59: #{tpu_custom_call.1} parent=5 // pred_region
        %s404 = ssub.s32 %s20, 2
        // Predicated region
        $region61: #{tpu_custom_call.1} parent=59 // pred_check
          %p405 = pneg %p143
        $region62: #{tpu_custom_call.1} parent=59 // pred_check_branch
          %407 = sbr.rel (%p405) target = $region64
        $region63: #{tpu_custom_call.1} parent=59 // pred_region
          %s408 = sand.u32 %s128, 1
          %s409 = scalar_lea.sflag [#allocation4], %s408
          %s410 = sand.u32 %s128, 1
          %s411 = smul.addr %s410, 8
          %s412 = scalar_lea.vmem [#allocation10], %s411
          %413 = dma.done %s409, 128
        $region64: #{tpu_custom_call.1} parent=59 // pred_fallthru
          _
      $region60: #{tpu_custom_call.1} parent=5 // pred_fallthru
        _
    $region6: #{tpu_custom_call.1} parent=1 // loop_footer
      %s24 = sadd.s32 1, %s20
    $region7: #{tpu_custom_call.1} parent=1 // loop_footer_branch
      %19 = sbr.rel target = $region3
    $region8: #{tpu_custom_call.1} parent=1 // loop_exit
      _
    %414 = vsyncpa [#allocation3], 1
    %s415 = scalar_lea.sflag [#allocation3], 1
    %416 = vsyncpa %s415, 1
    %417 = vsyncpa [#allocation6], 1
    %s418 = scalar_lea.sflag [#allocation6], 1
    %419 = vsyncpa %s418, 1
    %420 = vsyncpa [#allocation9], 1
    %421 = vsyncpa [#allocation4], 1
    %s422 = scalar_lea.sflag [#allocation4], 1
    %423 = vsyncpa %s422, 1

</llo_original>
